<compile_context>
chip_gen: v7x
topology: tpu7x:2x2x1
jax: 0.10.0
libtpu: 0.0.40
codegen_flags: <defaults>
</compile_context>

<pallas_src>
import functools

import jax
import jax.numpy as jnp
from jax import lax
from jax.experimental import pallas as pl
from jax.experimental.pallas import tpu as pltpu

_LANE = 128     # vreg lane width (minor dim)
_SUBLANE = 8    # vreg sublane width (second-minor dim)
_MAX_EXP = 6.0  # Spec2Emb.max_exp


# ----------------------------------------------------------------------------- helpers
def _round_up(x: int, m: int) -> int:
    return ((x + m - 1) // m) * m


def _pad2d(x: jnp.ndarray, rows: int, cols: int) -> jnp.ndarray:
    r, c = x.shape
    if r == rows and c == cols:
        return x
    return jnp.pad(x, ((0, rows - r), (0, cols - c)))


def _vmem_limit(*nbytes) -> int:
    est = sum(int(b) for b in nbytes) + (8 << 20)          # + slack for intermediates
    return int(min(64 << 20, max(est, 32 << 20)))


# ------------------------------------------------------------- kernel 1: embedding lookup
def _lookup_kernel(idx_ref, table_ref, out_ref):
    # idx_ref  : VMEM int32[G, TB]         (all flat indices, resident every step)
    # table_ref: VMEM f32  [E_pad, D_pad]  (whole padded table, resident every step)
    # out_ref  : VMEM f32  [TB, D_pad]     (one lane-dense block of gathered rows)
    i = pl.program_id(0)
    idx = idx_ref[i, :]                                            # (TB,) int32
    tb = out_ref.shape[0]
    e_pad = table_ref.shape[0]
    # One-hot on the VPU, gather as a single MXU matmul -> one full-block store.
    iota = lax.broadcasted_iota(jnp.int32, (tb, e_pad), 1)
    onehot = (idx[:, None] == iota).astype(table_ref.dtype)        # (TB, E_pad)
    out_ref[...] = jnp.dot(
        onehot, table_ref[...],
        precision=lax.Precision.HIGHEST,          # exact f32 gather (no bf16 rounding)
        preferred_element_type=jnp.float32,
    ).astype(out_ref.dtype)


def embedding_lookup(table_pad: jnp.ndarray, ids: jnp.ndarray, emb_dim: int) -> jnp.ndarray:
    """nn.Embedding forward: table[ids] -> ids.shape + (emb_dim,)."""
    e_pad, d_pad = table_pad.shape
    orig_shape = ids.shape
    idx = ids.reshape(-1).astype(jnp.int32)
    n = idx.shape[0]
    # Up to 512 gathered rows per grid step; a single step when n is small.
    tb = min(512, _round_up(max(n, 1), _SUBLANE))
    n_pad = _round_up(n, tb)
    if n_pad != n:
        idx = jnp.pad(idx, (0, n_pad - n))        # pad rows gather row 0, sliced off below
    g = n_pad // tb
    idx2d = idx.reshape(g, tb)

    out = pl.pallas_call(
        _lookup_kernel,
        out_shape=jax.ShapeDtypeStruct((n_pad, d_pad), table_pad.dtype),
        grid=(g,),
        in_specs=[
            pl.BlockSpec((g, tb), lambda i: (0, 0)),          # indices fully resident
            pl.BlockSpec((e_pad, d_pad), lambda i: (0, 0)),   # table fully resident
        ],
        out_specs=pl.BlockSpec((tb, d_pad), lambda i: (i, 0)),
        compiler_params=pltpu.CompilerParams(
            dimension_semantics=("parallel",),    # disjoint output blocks (v7x 2 TCs)
            vmem_limit_bytes=_vmem_limit(
                2 * table_pad.size * 4, 2 * idx2d.size * 4,
                2 * tb * d_pad * 4, tb * e_pad * 4),
        ),
    )(idx2d, table_pad)

    if n_pad != n or d_pad != emb_dim:
        out = out[:n, :emb_dim]
    return out.reshape(orig_shape + (emb_dim,))


# ----------------------------------------- kernel 2: fused _compute_embedding (weighted sum)
@functools.lru_cache(maxsize=None)
def _get_wsum_kernel(power: float):
    def kernel(mzs_ref, intens_ref, masks_ref, table_ref, out_ref):
        # mzs_ref/intens_ref/masks_ref : VMEM [Bb, S]
        # table_ref                    : VMEM f32 [E_pad, D_pad]  (resident)
        # out_ref                      : VMEM f32 [Bb, D_pad]
        idx = mzs_ref[...]
        masks = masks_ref[...]
        intens = intens_ref[...]
        if power == 1.0:                           # static (trace-time) specialisation
            w = masks * intens
        elif power == 0.5:
            w = masks * jnp.sqrt(intens)           # EUP sqrt, cheaper than generic pow
        else:
            w = masks * jnp.power(intens, jnp.float32(power))
        bb, s = idx.shape
        e_pad = table_ref.shape[0]
        # Weighted one-hot summed over the peak axis -> (Bb, E_pad), then one MXU matmul
        # against the table and one lane-dense full-block store.
        iota = lax.broadcasted_iota(jnp.int32, (bb, s, e_pad), 2)
        sel = idx[:, :, None] == iota                                   # (Bb, S, E_pad)
        acc = jnp.sum(jnp.where(sel, w[:, :, None], 0.0), axis=1)       # (Bb, E_pad)
        out_ref[...] = jnp.dot(
            acc, table_ref[...],
            precision=lax.Precision.HIGHEST,
            preferred_element_type=jnp.float32,
        ).astype(out_ref.dtype)

    return kernel


def weighted_embedding_sum(table_pad, mzs, intens, masks, power, emb_dim):
    """Fused Spec2Emb._compute_embedding: sum_s masks[b,s]*intens[b,s]**power * table[mzs[b,s]]."""
    e_pad, d_pad = table_pad.shape
    b, s = mzs.shape
    # Batch rows per grid step: as many as possible while the (Bb, S, E_pad) weighted
    # one-hot intermediate stays within a few MiB of VMEM.
    bb_cap = max(_SUBLANE, ((4 << 20) // (4 * s * e_pad)) // _SUBLANE * _SUBLANE)
    bb = min(128, bb_cap, _round_up(max(b, 1), _SUBLANE))
    b_pad = _round_up(b, bb)
    g = b_pad // bb
    mzs_p = _pad2d(mzs.astype(jnp.int32), b_pad, s)
    intens_p = _pad2d(intens.astype(jnp.float32), b_pad, s)
    masks_p = _pad2d(masks.astype(jnp.float32), b_pad, s)   # padded rows: weight 0

    out = pl.pallas_call(
        _get_wsum_kernel(float(power)),
        out_shape=jax.ShapeDtypeStruct((b_pad, d_pad), table_pad.dtype),
        grid=(g,),
        in_specs=[
            pl.BlockSpec((bb, s), lambda i: (i, 0)),
            pl.BlockSpec((bb, s), lambda i: (i, 0)),
            pl.BlockSpec((bb, s), lambda i: (i, 0)),
            pl.BlockSpec((e_pad, d_pad), lambda i: (0, 0)),   # table fully resident
        ],
        out_specs=pl.BlockSpec((bb, d_pad), lambda i: (i, 0)),
        compiler_params=pltpu.CompilerParams(
            dimension_semantics=("parallel",),
            vmem_limit_bytes=_vmem_limit(
                2 * table_pad.size * 4, 6 * bb * s * 4,
                2 * bb * d_pad * 4, 3 * bb * s * e_pad * 4),
        ),
    )(mzs_p, intens_p, masks_p, table_pad)

    if b_pad != b or d_pad != emb_dim:
        out = out[:b, :emb_dim]
    return out


# -------------------------------------------------------------------- module-level forward
def init_spec2emb_params(key, num_emb: int = 1000, emb_dim: int = 500):
    """nn.Embedding weights (N(0,1), as PyTorch default), pre-padded lane-dense."""
    k_con, k_cen = jax.random.split(key)
    emb_con = jax.random.normal(k_con, (num_emb, emb_dim), dtype=jnp.float32)
    emb_cen = jax.random.normal(k_cen, (num_emb, emb_dim), dtype=jnp.float32)
    e_pad = _round_up(num_emb, _LANE)
    d_pad = _round_up(emb_dim, _LANE)
    return {
        "emb_con": _pad2d(emb_con, e_pad, d_pad),
        "emb_cen": _pad2d(emb_cen, e_pad, d_pad),
        "num_emb": num_emb,
        "emb_dim": emb_dim,
    }


def _l2_normalize(x, eps=1e-12):
    norm = jnp.sqrt(jnp.sum(x * x, axis=-1, keepdims=True))
    return x / jnp.maximum(norm, eps)


def _triplet_margin_loss(anchor, positive, negative, margin=1.0, eps=1e-6):
    d_ap = jnp.sqrt(jnp.sum((anchor - positive + eps) ** 2, axis=-1))
    d_an = jnp.sqrt(jnp.sum((anchor - negative + eps) ** 2, axis=-1))
    return jnp.mean(jnp.maximum(d_ap - d_an + margin, 0.0))


def spec2emb_forward(params, data, mode="train", power=0.5):
    emb_con, emb_cen = params["emb_con"], params["emb_cen"]
    emb_dim = params["emb_dim"]
    if mode == "train":
        mzs_con, masks_con, poss_cen, batch_idx, negs_cen, masks_neg = data
        masks_con = masks_con.astype(jnp.float32)
        # emb_con(mzs_con)[batch_idx] * mask summed over peaks == fused weighted sum
        # over the batch-gathered indices (then divide by the mask sum).
        mzs_sel = jnp.take(mzs_con, batch_idx, axis=0)                     # (B, S)
        num = weighted_embedding_sum(emb_con, mzs_sel, jnp.ones_like(masks_con),
                                     masks_con, power=1.0, emb_dim=emb_dim)
        embs_con = num / jnp.sum(masks_con, axis=1, keepdims=True)         # (B, D)
        embs_pos = embedding_lookup(emb_cen, poss_cen, emb_dim)            # (B, D)
        embs_neg = embedding_lookup(emb_cen, negs_cen, emb_dim)            # (B, K, D)
        embs_neg = embs_neg * masks_neg.astype(jnp.float32)[..., None]
        pos_score = jnp.clip(jnp.sum(embs_con * embs_pos, axis=-1), -_MAX_EXP, _MAX_EXP)
        pos_score = -jax.nn.log_sigmoid(pos_score)
        neg_score = jnp.clip(jnp.einsum("bkd,bd->bk", embs_neg, embs_con),
                             -_MAX_EXP, _MAX_EXP)
        neg_score = jnp.sum(-jax.nn.log_sigmoid(-neg_score), axis=-1)
        return jnp.sum(pos_score + neg_score)
    elif mode == "emb":
        mzs_all, intens_all, masks_all = data
        return weighted_embedding_sum(emb_cen, mzs_all, intens_all, masks_all,
                                      power=power, emb_dim=emb_dim)
    elif mode == "finetune":
        data_mea, data_pre_hit, data_pre_nhit = data
        e_mea = _l2_normalize(weighted_embedding_sum(emb_cen, *data_mea,
                                                     power=power, emb_dim=emb_dim))
        e_hit = _l2_normalize(weighted_embedding_sum(emb_cen, *data_pre_hit,
                                                     power=power, emb_dim=emb_dim))
        e_nhit = _l2_normalize(weighted_embedding_sum(emb_cen, *data_pre_nhit,
                                                      power=power, emb_dim=emb_dim))
        return _triplet_margin_loss(e_mea, e_hit, e_nhit)
    else:
        raise ValueError("mode not exist")


# ------------------------------------------------------------------ pure-JAX reference
def _ref_compute_embedding(table, mzs, intens, masks, power):
    embs = table[mzs] * masks[..., None]
    return jnp.sum(embs * jnp.power(intens, power)[..., None], axis=1)


def spec2emb_reference(emb_con, emb_cen, data, mode="train", power=0.5):
    if mode == "train":
        mzs_con, masks_con, poss_cen, batch_idx, negs_cen, masks_neg = data
        embs_con = emb_con[mzs_con]
        embs_pos = emb_cen[poss_cen]
        embs_neg = emb_cen[negs_cen] * masks_neg[..., None]
        embs_con = embs_con[batch_idx] * masks_con[..., None]
        embs_con = embs_con.sum(axis=1) / masks_con.sum(axis=1)[:, None]
        pos_score = jnp.clip((embs_con * embs_pos).sum(-1), -_MAX_EXP, _MAX_EXP)
        pos_score = -jax.nn.log_sigmoid(pos_score)
        neg_score = jnp.clip(jnp.einsum("bkd,bd->bk", embs_neg, embs_con),
                             -_MAX_EXP, _MAX_EXP)
        neg_score = (-jax.nn.log_sigmoid(-neg_score)).sum(-1)
        return (pos_score + neg_score).sum()
    elif mode == "emb":
        return _ref_compute_embedding(emb_cen, *data, power)
    else:
        e_mea = _l2_normalize(_ref_compute_embedding(emb_cen, *data[0], power))
        e_hit = _l2_normalize(_ref_compute_embedding(emb_cen, *data[1], power))
        e_nhit = _l2_normalize(_ref_compute_embedding(emb_cen, *data[2], power))
        return _triplet_margin_loss(e_mea, e_hit, e_nhit)


# ------------------------------------------------------------------------------ demo
if __name__ == "__main__":
    num_emb, emb_dim = 64, 32            # small shapes consistent with the module
    B, S, K, N_CON = 2, 8, 4, 3
    power = 0.5

    keys = jax.random.split(jax.random.PRNGKey(0), 16)
    params = init_spec2emb_params(keys[0], num_emb=num_emb, emb_dim=emb_dim)
    emb_con_raw = params["emb_con"][:num_emb, :emb_dim]
    emb_cen_raw = params["emb_cen"][:num_emb, :emb_dim]

    def make_spectrum(key):
        k1, k2, k3 = jax.random.split(key, 3)
        mzs = jax.random.randint(k1, (B, S), 0, num_emb, dtype=jnp.int32)
        intens = jax.random.uniform(k2, (B, S), jnp.float32, 0.1, 1.0)
        masks = (jax.random.uniform(k3, (B, S)) > 0.3).astype(jnp.float32)
        masks = masks.at[:, 0].set(1.0)          # at least one live peak per spectrum
        return mzs, intens, masks

    # --- mode='emb' ---------------------------------------------------------------
    data_emb = make_spectrum(keys[1])
    out_emb = jax.block_until_ready(
        spec2emb_forward(params, data_emb, mode="emb", power=power))
    ref_emb = spec2emb_reference(emb_con_raw, emb_cen_raw, data_emb, mode="emb", power=power)
    assert out_emb.shape == (B, emb_dim)
    assert jnp.allclose(out_emb, ref_emb, rtol=2e-2, atol=2e-2), "emb mode mismatch"

    # --- mode='train' (default) ----------------------------------------------------
    mzs_con = jax.random.randint(keys[2], (N_CON, S), 0, num_emb, dtype=jnp.int32)
    batch_idx = jax.random.randint(keys[3], (B,), 0, N_CON, dtype=jnp.int32)
    masks_con = (jax.random.uniform(keys[4], (B, S)) > 0.3).astype(jnp.float32)
    masks_con = masks_con.at[:, 0].set(1.0)
    poss_cen = jax.random.randint(keys[5], (B,), 0, num_emb, dtype=jnp.int32)
    negs_cen = jax.random.randint(keys[6], (B, K), 0, num_emb, dtype=jnp.int32)
    masks_neg = (jax.random.uniform(keys[7], (B, K)) > 0.5).astype(jnp.float32)
    data_train = (mzs_con, masks_con, poss_cen, batch_idx, negs_cen, masks_neg)

    out_train = jax.block_until_ready(
        spec2emb_forward(params, data_train, mode="train", power=power))
    ref_train = spec2emb_reference(emb_con_raw, emb_cen_raw, data_train,
                                   mode="train", power=power)
    assert out_train.shape == ()
    assert jnp.allclose(out_train, ref_train, rtol=2e-2, atol=2e-2), "train mode mismatch"

    # --- mode='finetune' ------------------------------------------------------------
    data_ft = (make_spectrum(keys[8]), make_spectrum(keys[9]), make_spectrum(keys[10]))
    out_ft = jax.block_until_ready(
        spec2emb_forward(params, data_ft, mode="finetune", power=power))
    ref_ft = spec2emb_reference(emb_con_raw, emb_cen_raw, data_ft,
                                mode="finetune", power=power)
    assert out_ft.shape == ()
    assert jnp.allclose(out_ft, ref_ft, rtol=2e-2, atol=2e-2), "finetune mode mismatch"

    print("KERNEL_OK")
</pallas_src>

<mosaic_0001>
module attributes {stable_mosaic.version = 11 : i64} {
  func.func @kernel(%arg0: i32, %arg1: memref<8x8xi32, #tpu.memory_space<vmem>>, %arg2: memref<8x8xf32, #tpu.memory_space<vmem>>, %arg3: memref<8x8xf32, #tpu.memory_space<vmem>>, %arg4: memref<128x128xf32, #tpu.memory_space<vmem>>, %arg5: memref<8x128xf32, #tpu.memory_space<vmem>>) attributes {dimension_semantics = [#tpu.dimension_semantics<parallel>], iteration_bounds = array<i64: 1>, scalar_prefetch = 0 : i64, scratch_operands = 0 : i64, tpu.core_type = #tpu.core_type<tc>, window_params = [{transform_indices = @transform_0, window_bounds = array<i64: 8, 8>}, {transform_indices = @transform_1, window_bounds = array<i64: 8, 8>}, {transform_indices = @transform_2, window_bounds = array<i64: 8, 8>}, {pipeline_mode = #tpu.pipeline_mode<synchronous>, transform_indices = @transform_3, window_bounds = array<i64: 128, 128>}, {transform_indices = @transform_4, window_bounds = array<i64: 8, 128>}]} {
    %c0 = arith.constant 0 : index
    %c0_0 = arith.constant 0 : index
    %0 = vector.load %arg1[%c0, %c0_0] : memref<8x8xi32, #tpu.memory_space<vmem>>, vector<8x8xi32>
    %c0_1 = arith.constant 0 : index
    %c0_2 = arith.constant 0 : index
    %1 = vector.load %arg3[%c0_1, %c0_2] : memref<8x8xf32, #tpu.memory_space<vmem>>, vector<8x8xf32>
    %c0_3 = arith.constant 0 : index
    %c0_4 = arith.constant 0 : index
    %2 = vector.load %arg2[%c0_3, %c0_4] : memref<8x8xf32, #tpu.memory_space<vmem>>, vector<8x8xf32>
    %3 = math.sqrt %2 : vector<8x8xf32>
    %4 = arith.mulf %1, %3 : vector<8x8xf32>
    %5 = tpu.iota {dimensions = array<i32: 2>} : vector<8x8x128xi32>
    %6 = vector.shape_cast %0 : vector<8x8xi32> to vector<8x8x1xi32>
    %7 = vector.broadcast %6 : vector<8x8x1xi32> to vector<8x8x128xi32>
    %8 = arith.cmpi eq, %7, %5 : vector<8x8x128xi32>
    %9 = vector.shape_cast %4 : vector<8x8xf32> to vector<8x8x1xf32>
    %cst = arith.constant 0.000000e+00 : f32
    %10 = vector.shape_cast %9 : vector<8x8x1xf32> to vector<8x8x1xf32>
    %11 = vector.broadcast %10 : vector<8x8x1xf32> to vector<8x8x128xf32>
    %12 = vector.broadcast %cst : f32 to vector<8x8x128xf32>
    %13 = arith.select %8, %11, %12 : vector<8x8x128xi1>, vector<8x8x128xf32>
    %cst_5 = arith.constant dense<0.000000e+00> : vector<8x128xf32>
    %14 = vector.multi_reduction <add>, %13, %cst_5 [1] : vector<8x8x128xf32> to vector<8x128xf32>
    %c0_6 = arith.constant 0 : index
    %c0_7 = arith.constant 0 : index
    %15 = vector.load %arg4[%c0_6, %c0_7] : memref<128x128xf32, #tpu.memory_space<vmem>>, vector<128x128xf32>
    %cst_8 = arith.constant dense<0.000000e+00> : vector<8x128xf32>
    %16 = tpu.matmul %14, %15, %cst_8 {dimension_numbers = #tpu.dot_dimension_numbers<[1], [0], [0], [1], [0, 0, 1, 1], [], []>, precision = #tpu.contract_precision<fp32>} : vector<8x128xf32>, vector<128x128xf32>, vector<8x128xf32> -> vector<8x128xf32>
    %c0_9 = arith.constant 0 : index
    %c0_10 = arith.constant 0 : index
    %17 = vector.load %arg5[%c0_9, %c0_10] : memref<8x128xf32, #tpu.memory_space<vmem>>, vector<8x128xf32>
    tpu.vector_store %arg5[%c0_9, %c0_10], %16 {strides = array<i32>} : memref<8x128xf32, #tpu.memory_space<vmem>>, vector<8x128xf32>,
    return
  }
  func.func @transform_0(%arg0: i32) -> (i32, i32) {
    %c0_i32 = arith.constant 0 : i32
    %c0_i32_0 = arith.constant 0 : i32
    return %arg0, %c0_i32 : i32, i32
  }
  func.func @transform_1(%arg0: i32) -> (i32, i32) {
    %c0_i32 = arith.constant 0 : i32
    %c0_i32_0 = arith.constant 0 : i32
    return %arg0, %c0_i32 : i32, i32
  }
  func.func @transform_2(%arg0: i32) -> (i32, i32) {
    %c0_i32 = arith.constant 0 : i32
    %c0_i32_0 = arith.constant 0 : i32
    return %arg0, %c0_i32 : i32, i32
  }
  func.func @transform_3(%arg0: i32) -> (i32, i32) {
    %c0_i32 = arith.constant 0 : i32
    %c0_i32_0 = arith.constant 0 : i32
    %c0_i32_1 = arith.constant 0 : i32
    return %c0_i32, %c0_i32_0 : i32, i32
  }
  func.func @transform_4(%arg0: i32) -> (i32, i32) {
    %c0_i32 = arith.constant 0 : i32
    %c0_i32_0 = arith.constant 0 : i32
    return %arg0, %c0_i32 : i32, i32
  }
}

</mosaic_0001>

<llo_original>
// kernel: tpu_custom_call.1
$region0: #{tpu_custom_call.1}
  #allocation0 [shape = 'u32[]', space=smem, size = 0x4, offset = 0x4, fixed_abs, tag = 'smem constant byte address 0x4 - core index']
  #allocation1 [shape = 'u32[144,128]{1,0:T(1,128)}', space=vmem, size = 0x12000, scoped, tag = 'internal scratch']
  %s0 = inlined_call_operand.hbm [shape: s32[8,8], index: 0, kind: input, shape index: {}]
  %s1 = inlined_call_operand.hbm [shape: f32[8,8], index: 1, kind: input, shape index: {}]
  %s2 = inlined_call_operand.hbm [shape: f32[8,8], index: 2, kind: input, shape index: {}]
  %s3 = inlined_call_operand.hbm [shape: f32[128,128], index: 3, kind: input, shape index: {}]
  %s4 = inlined_call_operand.hbm [shape: f32[8,128], index: 4, kind: output, shape index: {}]
  %s5 = sld [smem:[#allocation0]]
  $region42: #{tpu_custom_call.1} parent=0
    _
  %s7 = ssub.s32 1, %s5
  %s8 = scalar_select 0, %s7, %s5
  $region1: #{tpu_custom_call.1} parent=0
    #allocation2 [shape = 'u8[4096]{0}', space=vmem, size = 0x1000, scoped, tag = 'input window, operand 0, single buffered']
    #allocation3 [shape = 's32[1]{0}', space=sflag, size = 0x4, scoped, tag = 'scoped memory for tpu_custom_call.1']
    #allocation4 [shape = 's32[1]{0}', space=sflag, size = 0x4, scoped, tag = 'scoped memory for tpu_custom_call.1']
    #allocation5 [shape = 'u8[4096]{0}', space=vmem, size = 0x1000, scoped, tag = 'input window, operand 1, single buffered']
    #allocation6 [shape = 's32[1]{0}', space=sflag, size = 0x4, scoped, tag = 'scoped memory for tpu_custom_call.1']
    #allocation7 [shape = 'u8[4096]{0}', space=vmem, size = 0x1000, scoped, tag = 'input window, operand 2, single buffered']
    #allocation8 [shape = 'u8[65536]{0}', space=vmem, size = 0x10000, scoped, tag = 'input window, operand 3, single buffered']
    #allocation9 [shape = 's32[1]{0}', space=sflag, size = 0x4, scoped, tag = 'scoped memory for tpu_custom_call.1']
    #allocation10 [shape = 'u8[4096]{0}', space=vmem, size = 0x1000, scoped, tag = 'output window, operand 0, single buffered']
    %9 = vsyncpa [#allocation3], 0
    %10 = vsyncpa [#allocation6], 0
    %11 = vsyncpa [#allocation9], 0
    %12 = vsyncpa [#allocation4], 0
    // Predicated region
    $region2: #{tpu_custom_call.1} parent=1 // pred_check
      _
    $region3: #{tpu_custom_call.1} parent=1 // pred_check_branch
      %14 = sbr.rel (0) target = $region5
    $region4: #{tpu_custom_call.1} parent=1 // pred_region
      %s16 = ssub.s32 128, 128
      %17 = vsyncadd [#allocation3], %s16
      %s19 = sshll.u32 [#allocation2], 4
      %s20 = int_to_ptr.vmem [resolvable:$true] %s19
      %22 = dma.hbm_to_vmem [thread:$0]  %s0, 128, %s20, [#allocation3]
    $region5: #{tpu_custom_call.1} parent=1 // pred_fallthru
      _
    // Predicated region
    $region6: #{tpu_custom_call.1} parent=1 // pred_check
      _
    $region7: #{tpu_custom_call.1} parent=1 // pred_check_branch
      %24 = sbr.rel (0) target = $region9
    $region8: #{tpu_custom_call.1} parent=1 // pred_region
      %s26 = ssub.s32 128, 128
      %27 = vsyncadd [#allocation6], %s26
      %s29 = sshll.u32 [#allocation5], 4
      %s30 = int_to_ptr.vmem [resolvable:$true] %s29
      %32 = dma.hbm_to_vmem [thread:$0]  %s1, 128, %s30, [#allocation6]
    $region9: #{tpu_custom_call.1} parent=1 // pred_fallthru
      _
    // Predicated region
    $region10: #{tpu_custom_call.1} parent=1 // pred_check
      _
    $region11: #{tpu_custom_call.1} parent=1 // pred_check_branch
      %34 = sbr.rel (0) target = $region13
    $region12: #{tpu_custom_call.1} parent=1 // pred_region
      %s36 = ssub.s32 128, 128
      %37 = vsyncadd [#allocation6], %s36
      %s39 = sshll.u32 [#allocation7], 4
      %s40 = int_to_ptr.vmem [resolvable:$true] %s39
      %42 = dma.hbm_to_vmem [thread:$0]  %s2, 128, %s40, [#allocation6]
    $region13: #{tpu_custom_call.1} parent=1 // pred_fallthru
      _
    // Predicated region
    $region14: #{tpu_custom_call.1} parent=1 // pred_check
      _
    $region15: #{tpu_custom_call.1} parent=1 // pred_check_branch
      %44 = sbr.rel (0) target = $region17
    $region16: #{tpu_custom_call.1} parent=1 // pred_region
      %s46 = ssub.s32 2048, 2048
      %47 = vsyncadd [#allocation9], %s46
      %s48 = sshll.u32 [#allocation8], 4
      %s49 = int_to_ptr.vmem [resolvable:$true] %s48
      %54 = dma.hbm_to_vmem [thread:$0]  %s3, 2048, %s49, [#allocation9], 128, 128, 8
    $region17: #{tpu_custom_call.1} parent=1 // pred_fallthru
      _
    // Predicated region
    $region18: #{tpu_custom_call.1} parent=1 // pred_check
      _
    $region19: #{tpu_custom_call.1} parent=1 // pred_check_branch
      %56 = sbr.rel (0) target = $region21
    $region20: #{tpu_custom_call.1} parent=1 // pred_region
      %57 = dma.done [#allocation3], 128
    $region21: #{tpu_custom_call.1} parent=1 // pred_fallthru
      _
    // Predicated region
    $region22: #{tpu_custom_call.1} parent=1 // pred_check
      _
    $region23: #{tpu_custom_call.1} parent=1 // pred_check_branch
      %59 = sbr.rel (0) target = $region25
    $region24: #{tpu_custom_call.1} parent=1 // pred_region
      %60 = dma.done [#allocation6], 128
    $region25: #{tpu_custom_call.1} parent=1 // pred_fallthru
      _
    // Predicated region
    $region26: #{tpu_custom_call.1} parent=1 // pred_check
      _
    $region27: #{tpu_custom_call.1} parent=1 // pred_check_branch
      %62 = sbr.rel (0) target = $region29
    $region28: #{tpu_custom_call.1} parent=1 // pred_region
      %63 = dma.done [#allocation6], 128
    $region29: #{tpu_custom_call.1} parent=1 // pred_fallthru
      _
    // Predicated region
    $region30: #{tpu_custom_call.1} parent=1 // pred_check
      _
    $region31: #{tpu_custom_call.1} parent=1 // pred_check_branch
      %65 = sbr.rel (0) target = $region33
    $region32: #{tpu_custom_call.1} parent=1 // pred_region
      %66 = dma.done [#allocation9], 2048
    $region33: #{tpu_custom_call.1} parent=1 // pred_fallthru
      _
    %v67 = vld [vmem:[#allocation2] sm:$0xff]
    %v68 = vld [vmem:[#allocation7] sm:$0xff]
    %v69 = vld [vmem:[#allocation5] sm:$0xff]
    %v70 = vrsqrt.pop %v69
    %v71 = vmul.f32 %v69, %v70
    %vm72 = vcmp.eq.f32.partialorder %v69, inf
    %v73 = vsel %vm72, %v69, %v71
    %vm74 = vcmp.eq.f32.partialorder %v69, 0.0
    %v75 = vand.u32 %v69, 2147483648
    %v76 = vsel %vm74, %v75, %v73
    %v77 = vmul.f32 %v68, %v76
    %v78 = vlaneseq
    %v79 = vand.u32 %v78, 127
    %v80 = vlaneseq
    %v81 = vshrl.u32 %v80, 7
    %v82 = vsub.s32 0, %v81
    %v83 = vrot.slane %v67, %v82
    %85 = vbcast.lane.b32.xlu0 %v83, 256
    %v86 = vpop.permute.xlu0 %85
    %v87 = vlaneseq
    %v88 = vshrl.u32 %v87, 7
    %v89 = vsub.s32 1, %v88
    %v90 = vrot.slane %v67, %v89
    %92 = vbcast.lane.b32.xlu0 %v90, 256
    %v93 = vpop.permute.xlu0 %92
    %v94 = vlaneseq
    %v95 = vshrl.u32 %v94, 7
    %v96 = vsub.s32 2, %v95
    %v97 = vrot.slane %v67, %v96
    %99 = vbcast.lane.b32.xlu0 %v97, 256
    %v100 = vpop.permute.xlu0 %99
    %v101 = vlaneseq
    %v102 = vshrl.u32 %v101, 7
    %v103 = vsub.s32 3, %v102
    %v104 = vrot.slane %v67, %v103
    %106 = vbcast.lane.b32.xlu0 %v104, 256
    %v107 = vpop.permute.xlu0 %106
    %v108 = vlaneseq
    %v109 = vshrl.u32 %v108, 7
    %v110 = vsub.s32 4, %v109
    %v111 = vrot.slane %v67, %v110
    %113 = vbcast.lane.b32.xlu0 %v111, 256
    %v114 = vpop.permute.xlu0 %113
    %v115 = vlaneseq
    %v116 = vshrl.u32 %v115, 7
    %v117 = vsub.s32 5, %v116
    %v118 = vrot.slane %v67, %v117
    %120 = vbcast.lane.b32.xlu0 %v118, 256
    %v121 = vpop.permute.xlu0 %120
    %v122 = vlaneseq
    %v123 = vshrl.u32 %v122, 7
    %v124 = vsub.s32 6, %v123
    %v125 = vrot.slane %v67, %v124
    %127 = vbcast.lane.b32.xlu0 %v125, 256
    %v128 = vpop.permute.xlu0 %127
    %v129 = vlaneseq
    %v130 = vshrl.u32 %v129, 7
    %v131 = vsub.s32 7, %v130
    %v132 = vrot.slane %v67, %v131
    %134 = vbcast.lane.b32.xlu0 %v132, 256
    %v135 = vpop.permute.xlu0 %134
    %vm136 = vcmp.eq.s32.totalorder %v86, %v79
    %vm137 = vcmp.eq.s32.totalorder %v93, %v79
    %vm138 = vcmp.eq.s32.totalorder %v100, %v79
    %vm139 = vcmp.eq.s32.totalorder %v107, %v79
    %vm140 = vcmp.eq.s32.totalorder %v114, %v79
    %vm141 = vcmp.eq.s32.totalorder %v121, %v79
    %vm142 = vcmp.eq.s32.totalorder %v128, %v79
    %vm143 = vcmp.eq.s32.totalorder %v135, %v79
    %v144 = vlaneseq
    %v145 = vshrl.u32 %v144, 7
    %v146 = vsub.s32 0, %v145
    %v147 = vrot.slane %v77, %v146
    %149 = vbcast.lane.b32.xlu0 %v147, 256
    %v150 = vpop.permute.xlu0 %149
    %v151 = vlaneseq
    %v152 = vshrl.u32 %v151, 7
    %v153 = vsub.s32 1, %v152
    %v154 = vrot.slane %v77, %v153
    %156 = vbcast.lane.b32.xlu0 %v154, 256
    %v157 = vpop.permute.xlu0 %156
    %v158 = vlaneseq
    %v159 = vshrl.u32 %v158, 7
    %v160 = vsub.s32 2, %v159
    %v161 = vrot.slane %v77, %v160
    %163 = vbcast.lane.b32.xlu0 %v161, 256
    %v164 = vpop.permute.xlu0 %163
    %v165 = vlaneseq
    %v166 = vshrl.u32 %v165, 7
    %v167 = vsub.s32 3, %v166
    %v168 = vrot.slane %v77, %v167
    %170 = vbcast.lane.b32.xlu0 %v168, 256
    %v171 = vpop.permute.xlu0 %170
    %v172 = vlaneseq
    %v173 = vshrl.u32 %v172, 7
    %v174 = vsub.s32 4, %v173
    %v175 = vrot.slane %v77, %v174
    %177 = vbcast.lane.b32.xlu0 %v175, 256
    %v178 = vpop.permute.xlu0 %177
    %v179 = vlaneseq
    %v180 = vshrl.u32 %v179, 7
    %v181 = vsub.s32 5, %v180
    %v182 = vrot.slane %v77, %v181
    %184 = vbcast.lane.b32.xlu0 %v182, 256
    %v185 = vpop.permute.xlu0 %184
    %v186 = vlaneseq
    %v187 = vshrl.u32 %v186, 7
    %v188 = vsub.s32 6, %v187
    %v189 = vrot.slane %v77, %v188
    %191 = vbcast.lane.b32.xlu0 %v189, 256
    %v192 = vpop.permute.xlu0 %191
    %v193 = vlaneseq
    %v194 = vshrl.u32 %v193, 7
    %v195 = vsub.s32 7, %v194
    %v196 = vrot.slane %v77, %v195
    %198 = vbcast.lane.b32.xlu0 %v196, 256
    %v199 = vpop.permute.xlu0 %198
    %v200 = vsel %vm136, %v150, 0.0
    %v201 = vsel %vm137, %v157, 0.0
    %v202 = vsel %vm138, %v164, 0.0
    %v203 = vsel %vm139, %v171, 0.0
    %v204 = vsel %vm140, %v178, 0.0
    %v205 = vsel %vm141, %v185, 0.0
    %v206 = vsel %vm142, %v192, 0.0
    %v207 = vsel %vm143, %v199, 0.0
    %v208 = vrot.slane %v200, 4
    %v209 = vadd.f32 %v200, %v208
    %v210 = vrot.slane %v209, 2
    %v211 = vadd.f32 %v209, %v210
    %v212 = vrot.slane %v211, 1
    %v213 = vadd.f32 %v211, %v212
    %v214 = vrot.slane %v201, 4
    %v215 = vadd.f32 %v201, %v214
    %v216 = vrot.slane %v215, 2
    %v217 = vadd.f32 %v215, %v216
    %v218 = vrot.slane %v217, 1
    %v219 = vadd.f32 %v217, %v218
    %v220 = vrot.slane %v202, 4
    %v221 = vadd.f32 %v202, %v220
    %v222 = vrot.slane %v221, 2
    %v223 = vadd.f32 %v221, %v222
    %v224 = vrot.slane %v223, 1
    %v225 = vadd.f32 %v223, %v224
    %v226 = vrot.slane %v203, 4
    %v227 = vadd.f32 %v203, %v226
    %v228 = vrot.slane %v227, 2
    %v229 = vadd.f32 %v227, %v228
    %v230 = vrot.slane %v229, 1
    %v231 = vadd.f32 %v229, %v230
    %v232 = vrot.slane %v204, 4
    %v233 = vadd.f32 %v204, %v232
    %v234 = vrot.slane %v233, 2
    %v235 = vadd.f32 %v233, %v234
    %v236 = vrot.slane %v235, 1
    %v237 = vadd.f32 %v235, %v236
    %v238 = vrot.slane %v205, 4
    %v239 = vadd.f32 %v205, %v238
    %v240 = vrot.slane %v239, 2
    %v241 = vadd.f32 %v239, %v240
    %v242 = vrot.slane %v241, 1
    %v243 = vadd.f32 %v241, %v242
    %v244 = vrot.slane %v206, 4
    %v245 = vadd.f32 %v206, %v244
    %v246 = vrot.slane %v245, 2
    %v247 = vadd.f32 %v245, %v246
    %v248 = vrot.slane %v247, 1
    %v249 = vadd.f32 %v247, %v248
    %v250 = vrot.slane %v207, 4
    %v251 = vadd.f32 %v207, %v250
    %v252 = vrot.slane %v251, 2
    %v253 = vadd.f32 %v251, %v252
    %v254 = vrot.slane %v253, 1
    %v255 = vadd.f32 %v253, %v254
    %v256 = vld [vmem:[#allocation8] sm:$0xff]
    %v257 = vld [vmem:[#allocation8 + $0x8] sm:$0xff]
    %v258 = vld [vmem:[#allocation8 + $0x10] sm:$0xff]
    %v259 = vld [vmem:[#allocation8 + $0x18] sm:$0xff]
    %v260 = vld [vmem:[#allocation8 + $0x20] sm:$0xff]
    %v261 = vld [vmem:[#allocation8 + $0x28] sm:$0xff]
    %v262 = vld [vmem:[#allocation8 + $0x30] sm:$0xff]
    %v263 = vld [vmem:[#allocation8 + $0x38] sm:$0xff]
    %v264 = vld [vmem:[#allocation8 + $0x40] sm:$0xff]
    %v265 = vld [vmem:[#allocation8 + $0x48] sm:$0xff]
    %v266 = vld [vmem:[#allocation8 + $0x50] sm:$0xff]
    %v267 = vld [vmem:[#allocation8 + $0x58] sm:$0xff]
    %v268 = vld [vmem:[#allocation8 + $0x60] sm:$0xff]
    %v269 = vld [vmem:[#allocation8 + $0x68] sm:$0xff]
    %v270 = vld [vmem:[#allocation8 + $0x70] sm:$0xff]
    %v271 = vld [vmem:[#allocation8 + $0x78] sm:$0xff]
    %vm280 = vcmask 1041409
    %v281 = vsel %vm280, %v219, %v213
    %vm282 = vcmask 1042434
    %v283 = vsel %vm282, %v225, %v281
    %vm284 = vcmask 1043459
    %v285 = vsel %vm284, %v231, %v283
    %vm286 = vcmask 1044484
    %v287 = vsel %vm286, %v237, %v285
    %vm288 = vcmask 1045509
    %v289 = vsel %vm288, %v243, %v287
    %vm290 = vcmask 1046534
    %v291 = vsel %vm290, %v249, %v289
    %vm292 = vcmask 1047559
    %v293 = vsel %vm292, %v255, %v291
    %295 = vmatprep.subr.mxu0 0.0
    %v296 = vand.u32 %v256, 4294901760
    %297 = vmatpush1.msra.mxu0 %v296
    %298 = vmatprep.subr.mxu0 0.0
    %v299 = vand.u32 %v257, 4294901760
    %300 = vmatpush1.msra.mxu0 %v299
    %301 = vmatprep.subr.mxu0 0.0
    %v302 = vand.u32 %v258, 4294901760
    %303 = vmatpush1.msra.mxu0 %v302
    %304 = vmatprep.subr.mxu0 0.0
    %v305 = vand.u32 %v259, 4294901760
    %306 = vmatpush1.msra.mxu0 %v305
    %307 = vmatprep.subr.mxu0 0.0
    %v308 = vand.u32 %v260, 4294901760
    %309 = vmatpush1.msra.mxu0 %v308
    %310 = vmatprep.subr.mxu0 0.0
    %v311 = vand.u32 %v261, 4294901760
    %312 = vmatpush1.msra.mxu0 %v311
    %313 = vmatprep.subr.mxu0 0.0
    %v314 = vand.u32 %v262, 4294901760
    %315 = vmatpush1.msra.mxu0 %v314
    %316 = vmatprep.subr.mxu0 0.0
    %v317 = vand.u32 %v263, 4294901760
    %318 = vmatpush1.msra.mxu0 %v317
    %319 = vmatprep.subr.mxu0 0.0
    %v320 = vand.u32 %v264, 4294901760
    %321 = vmatpush1.msra.mxu0 %v320
    %322 = vmatprep.subr.mxu0 0.0
    %v323 = vand.u32 %v265, 4294901760
    %324 = vmatpush1.msra.mxu0 %v323
    %325 = vmatprep.subr.mxu0 0.0
    %v326 = vand.u32 %v266, 4294901760
    %327 = vmatpush1.msra.mxu0 %v326
    %328 = vmatprep.subr.mxu0 0.0
    %v329 = vand.u32 %v267, 4294901760
    %330 = vmatpush1.msra.mxu0 %v329
    %331 = vmatprep.subr.mxu0 0.0
    %v332 = vand.u32 %v268, 4294901760
    %333 = vmatpush1.msra.mxu0 %v332
    %334 = vmatprep.subr.mxu0 0.0
    %v335 = vand.u32 %v269, 4294901760
    %336 = vmatpush1.msra.mxu0 %v335
    %337 = vmatprep.subr.mxu0 0.0
    %v338 = vand.u32 %v270, 4294901760
    %339 = vmatpush1.msra.mxu0 %v338
    %340 = vmatprep.subr.mxu0 0.0
    %v341 = vand.u32 %v271, 4294901760
    %342 = vmatpush1.msra.mxu0 %v341
    %343 = vmatprep.subr.mxu0 0.0
    %344 = vmatpush1.msra.mxu0 0.0
    %345 = vmatprep.subr.mxu0 0.0
    %346 = vmatpush1.msra.mxu0 0.0
    %347 = vmatprep.subr.mxu0 0.0
    %348 = vmatpush1.msra.mxu0 0.0
    %349 = vmatprep.subr.mxu0 0.0
    %350 = vmatpush1.msra.mxu0 0.0
    %351 = vmatprep.subr.mxu0 0.0
    %352 = vmatpush1.msra.mxu0 0.0
    %353 = vmatprep.subr.mxu0 0.0
    %354 = vmatpush1.msra.mxu0 0.0
    %355 = vmatprep.subr.mxu0 0.0
    %356 = vmatpush1.msra.mxu0 0.0
    %357 = vmatprep.subr.mxu0 0.0
    %358 = vmatpush1.msra.mxu0 0.0
    %359 = vmatprep.subr.mxu0 0.0
    %360 = vmatpush1.msra.mxu0 0.0
    %361 = vmatprep.subr.mxu0 0.0
    %362 = vmatpush1.msra.mxu0 0.0
    %363 = vmatprep.subr.mxu0 0.0
    %364 = vmatpush1.msra.mxu0 0.0
    %365 = vmatprep.subr.mxu0 0.0
    %366 = vmatpush1.msra.mxu0 0.0
    %367 = vmatprep.subr.mxu0 0.0
    %368 = vmatpush1.msra.mxu0 0.0
    %369 = vmatprep.subr.mxu0 0.0
    %370 = vmatpush1.msra.mxu0 0.0
    %371 = vmatprep.subr.mxu0 0.0
    %372 = vmatpush1.msra.mxu0 0.0
    %373 = vmatprep.subr.mxu0 0.0
    %374 = vmatpush1.msra.mxu0 0.0
    %375 = vmatprep.mubr.f32.mxu0 0.0
    %v376 = vand.u32 %v293, 4294901760
    %v377 = vsub.f32 %v293, %v376
    %v378 = vand.u32 %v377, 4294901760
    %v379 = vsub.f32 %v377, %v378
    %v380 = vand.u32 %v379, 4294901760
    %381 = vmatmul.mubr.f32.gmra.mrb[0].mxu0 %v380
    %v382 = vpop.f32.mrb[0].mxu0
    %v383 = vadd.f32 0.0, %v382
    %v384 = vpop.f32.mrb[0].mxu0
    %385 = vdwg.mxu0
    %386 = vmatprep.subr.mxu0 0.0
    %v387 = vand.u32 %v256, 4294901760
    %v388 = vsub.f32 %v256, %v387
    %v389 = vand.u32 %v388, 4294901760
    %v390 = vsub.f32 %v388, %v389
    %v391 = vand.u32 %v390, 4294901760
    %392 = vmatpush1.msra.mxu0 %v391
    %393 = vmatprep.subr.mxu0 0.0
    %v394 = vand.u32 %v257, 4294901760
    %v395 = vsub.f32 %v257, %v394
    %v396 = vand.u32 %v395, 4294901760
    %v397 = vsub.f32 %v395, %v396
    %v398 = vand.u32 %v397, 4294901760
    %399 = vmatpush1.msra.mxu0 %v398
    %400 = vmatprep.subr.mxu0 0.0
    %v401 = vand.u32 %v258, 4294901760
    %v402 = vsub.f32 %v258, %v401
    %v403 = vand.u32 %v402, 4294901760
    %v404 = vsub.f32 %v402, %v403
    %v405 = vand.u32 %v404, 4294901760
    %406 = vmatpush1.msra.mxu0 %v405
    %407 = vmatprep.subr.mxu0 0.0
    %v408 = vand.u32 %v259, 4294901760
    %v409 = vsub.f32 %v259, %v408
    %v410 = vand.u32 %v409, 4294901760
    %v411 = vsub.f32 %v409, %v410
    %v412 = vand.u32 %v411, 4294901760
    %413 = vmatpush1.msra.mxu0 %v412
    %414 = vmatprep.subr.mxu0 0.0
    %v415 = vand.u32 %v260, 4294901760
    %v416 = vsub.f32 %v260, %v415
    %v417 = vand.u32 %v416, 4294901760
    %v418 = vsub.f32 %v416, %v417
    %v419 = vand.u32 %v418, 4294901760
    %420 = vmatpush1.msra.mxu0 %v419
    %421 = vmatprep.subr.mxu0 0.0
    %v422 = vand.u32 %v261, 4294901760
    %v423 = vsub.f32 %v261, %v422
    %v424 = vand.u32 %v423, 4294901760
    %v425 = vsub.f32 %v423, %v424
    %v426 = vand.u32 %v425, 4294901760
    %427 = vmatpush1.msra.mxu0 %v426
    %428 = vmatprep.subr.mxu0 0.0
    %v429 = vand.u32 %v262, 4294901760
    %v430 = vsub.f32 %v262, %v429
    %v431 = vand.u32 %v430, 4294901760
    %v432 = vsub.f32 %v430, %v431
    %v433 = vand.u32 %v432, 4294901760
    %434 = vmatpush1.msra.mxu0 %v433
    %435 = vmatprep.subr.mxu0 0.0
    %v436 = vand.u32 %v263, 4294901760
    %v437 = vsub.f32 %v263, %v436
    %v438 = vand.u32 %v437, 4294901760
    %v439 = vsub.f32 %v437, %v438
    %v440 = vand.u32 %v439, 4294901760
    %441 = vmatpush1.msra.mxu0 %v440
    %442 = vmatprep.subr.mxu0 0.0
    %v443 = vand.u32 %v264, 4294901760
    %v444 = vsub.f32 %v264, %v443
    %v445 = vand.u32 %v444, 4294901760
    %v446 = vsub.f32 %v444, %v445
    %v447 = vand.u32 %v446, 4294901760
    %448 = vmatpush1.msra.mxu0 %v447
    %449 = vmatprep.subr.mxu0 0.0
    %v450 = vand.u32 %v265, 4294901760
    %v451 = vsub.f32 %v265, %v450
    %v452 = vand.u32 %v451, 4294901760
    %v453 = vsub.f32 %v451, %v452
    %v454 = vand.u32 %v453, 4294901760
    %455 = vmatpush1.msra.mxu0 %v454
    %456 = vmatprep.subr.mxu0 0.0
    %v457 = vand.u32 %v266, 4294901760
    %v458 = vsub.f32 %v266, %v457
    %v459 = vand.u32 %v458, 4294901760
    %v460 = vsub.f32 %v458, %v459
    %v461 = vand.u32 %v460, 4294901760
    %462 = vmatpush1.msra.mxu0 %v461
    %463 = vmatprep.subr.mxu0 0.0
    %v464 = vand.u32 %v267, 4294901760
    %v465 = vsub.f32 %v267, %v464
    %v466 = vand.u32 %v465, 4294901760
    %v467 = vsub.f32 %v465, %v466
    %v468 = vand.u32 %v467, 4294901760
    %469 = vmatpush1.msra.mxu0 %v468
    %470 = vmatprep.subr.mxu0 0.0
    %v471 = vand.u32 %v268, 4294901760
    %v472 = vsub.f32 %v268, %v471
    %v473 = vand.u32 %v472, 4294901760
    %v474 = vsub.f32 %v472, %v473
    %v475 = vand.u32 %v474, 4294901760
    %476 = vmatpush1.msra.mxu0 %v475
    %477 = vmatprep.subr.mxu0 0.0
    %v478 = vand.u32 %v269, 4294901760
    %v479 = vsub.f32 %v269, %v478
    %v480 = vand.u32 %v479, 4294901760
    %v481 = vsub.f32 %v479, %v480
    %v482 = vand.u32 %v481, 4294901760
    %483 = vmatpush1.msra.mxu0 %v482
    %484 = vmatprep.subr.mxu0 0.0
    %v485 = vand.u32 %v270, 4294901760
    %v486 = vsub.f32 %v270, %v485
    %v487 = vand.u32 %v486, 4294901760
    %v488 = vsub.f32 %v486, %v487
    %v489 = vand.u32 %v488, 4294901760
    %490 = vmatpush1.msra.mxu0 %v489
    %491 = vmatprep.subr.mxu0 0.0
    %v492 = vand.u32 %v271, 4294901760
    %v493 = vsub.f32 %v271, %v492
    %v494 = vand.u32 %v493, 4294901760
    %v495 = vsub.f32 %v493, %v494
    %v496 = vand.u32 %v495, 4294901760
    %497 = vmatpush1.msra.mxu0 %v496
    %498 = vmatprep.subr.mxu0 0.0
    %499 = vmatpush1.msra.mxu0 0.0
    %500 = vmatprep.subr.mxu0 0.0
    %501 = vmatpush1.msra.mxu0 0.0
    %502 = vmatprep.subr.mxu0 0.0
    %503 = vmatpush1.msra.mxu0 0.0
    %504 = vmatprep.subr.mxu0 0.0
    %505 = vmatpush1.msra.mxu0 0.0
    %506 = vmatprep.subr.mxu0 0.0
    %507 = vmatpush1.msra.mxu0 0.0
    %508 = vmatprep.subr.mxu0 0.0
    %509 = vmatpush1.msra.mxu0 0.0
    %510 = vmatprep.subr.mxu0 0.0
    %511 = vmatpush1.msra.mxu0 0.0
    %512 = vmatprep.subr.mxu0 0.0
    %513 = vmatpush1.msra.mxu0 0.0
    %514 = vmatprep.subr.mxu0 0.0
    %515 = vmatpush1.msra.mxu0 0.0
    %516 = vmatprep.subr.mxu0 0.0
    %517 = vmatpush1.msra.mxu0 0.0
    %518 = vmatprep.subr.mxu0 0.0
    %519 = vmatpush1.msra.mxu0 0.0
    %520 = vmatprep.subr.mxu0 0.0
    %521 = vmatpush1.msra.mxu0 0.0
    %522 = vmatprep.subr.mxu0 0.0
    %523 = vmatpush1.msra.mxu0 0.0
    %524 = vmatprep.subr.mxu0 0.0
    %525 = vmatpush1.msra.mxu0 0.0
    %526 = vmatprep.subr.mxu0 0.0
    %527 = vmatpush1.msra.mxu0 0.0
    %528 = vmatprep.subr.mxu0 0.0
    %529 = vmatpush1.msra.mxu0 0.0
    %530 = vmatprep.mubr.f32.mxu0 0.0
    %v531 = vand.u32 %v293, 4294901760
    %532 = vmatmul.mubr.f32.gmra.mrb[0].mxu0 %v531
    %v533 = vpop.f32.mrb[0].mxu0
    %v534 = vadd.f32 %v383, %v533
    %v535 = vpop.f32.mrb[0].mxu0
    %536 = vdwg.mxu0
    %537 = vmatprep.subr.mxu0 0.0
    %v538 = vand.u32 %v256, 4294901760
    %v539 = vsub.f32 %v256, %v538
    %540 = vmatpush1.msra.mxu0 %v539
    %541 = vmatprep.subr.mxu0 0.0
    %v542 = vand.u32 %v257, 4294901760
    %v543 = vsub.f32 %v257, %v542
    %544 = vmatpush1.msra.mxu0 %v543
    %545 = vmatprep.subr.mxu0 0.0
    %v546 = vand.u32 %v258, 4294901760
    %v547 = vsub.f32 %v258, %v546
    %548 = vmatpush1.msra.mxu0 %v547
    %549 = vmatprep.subr.mxu0 0.0
    %v550 = vand.u32 %v259, 4294901760
    %v551 = vsub.f32 %v259, %v550
    %552 = vmatpush1.msra.mxu0 %v551
    %553 = vmatprep.subr.mxu0 0.0
    %v554 = vand.u32 %v260, 4294901760
    %v555 = vsub.f32 %v260, %v554
    %556 = vmatpush1.msra.mxu0 %v555
    %557 = vmatprep.subr.mxu0 0.0
    %v558 = vand.u32 %v261, 4294901760
    %v559 = vsub.f32 %v261, %v558
    %560 = vmatpush1.msra.mxu0 %v559
    %561 = vmatprep.subr.mxu0 0.0
    %v562 = vand.u32 %v262, 4294901760
    %v563 = vsub.f32 %v262, %v562
    %564 = vmatpush1.msra.mxu0 %v563
    %565 = vmatprep.subr.mxu0 0.0
    %v566 = vand.u32 %v263, 4294901760
    %v567 = vsub.f32 %v263, %v566
    %568 = vmatpush1.msra.mxu0 %v567
    %569 = vmatprep.subr.mxu0 0.0
    %v570 = vand.u32 %v264, 4294901760
    %v571 = vsub.f32 %v264, %v570
    %572 = vmatpush1.msra.mxu0 %v571
    %573 = vmatprep.subr.mxu0 0.0
    %v574 = vand.u32 %v265, 4294901760
    %v575 = vsub.f32 %v265, %v574
    %576 = vmatpush1.msra.mxu0 %v575
    %577 = vmatprep.subr.mxu0 0.0
    %v578 = vand.u32 %v266, 4294901760
    %v579 = vsub.f32 %v266, %v578
    %580 = vmatpush1.msra.mxu0 %v579
    %581 = vmatprep.subr.mxu0 0.0
    %v582 = vand.u32 %v267, 4294901760
    %v583 = vsub.f32 %v267, %v582
    %584 = vmatpush1.msra.mxu0 %v583
    %585 = vmatprep.subr.mxu0 0.0
    %v586 = vand.u32 %v268, 4294901760
    %v587 = vsub.f32 %v268, %v586
    %588 = vmatpush1.msra.mxu0 %v587
    %589 = vmatprep.subr.mxu0 0.0
    %v590 = vand.u32 %v269, 4294901760
    %v591 = vsub.f32 %v269, %v590
    %592 = vmatpush1.msra.mxu0 %v591
    %593 = vmatprep.subr.mxu0 0.0
    %v594 = vand.u32 %v270, 4294901760
    %v595 = vsub.f32 %v270, %v594
    %596 = vmatpush1.msra.mxu0 %v595
    %597 = vmatprep.subr.mxu0 0.0
    %v598 = vand.u32 %v271, 4294901760
    %v599 = vsub.f32 %v271, %v598
    %600 = vmatpush1.msra.mxu0 %v599
    %601 = vmatprep.subr.mxu0 0.0
    %602 = vmatpush1.msra.mxu0 0.0
    %603 = vmatprep.subr.mxu0 0.0
    %604 = vmatpush1.msra.mxu0 0.0
    %605 = vmatprep.subr.mxu0 0.0
    %606 = vmatpush1.msra.mxu0 0.0
    %607 = vmatprep.subr.mxu0 0.0
    %608 = vmatpush1.msra.mxu0 0.0
    %609 = vmatprep.subr.mxu0 0.0
    %610 = vmatpush1.msra.mxu0 0.0
    %611 = vmatprep.subr.mxu0 0.0
    %612 = vmatpush1.msra.mxu0 0.0
    %613 = vmatprep.subr.mxu0 0.0
    %614 = vmatpush1.msra.mxu0 0.0
    %615 = vmatprep.subr.mxu0 0.0
    %616 = vmatpush1.msra.mxu0 0.0
    %617 = vmatprep.subr.mxu0 0.0
    %618 = vmatpush1.msra.mxu0 0.0
    %619 = vmatprep.subr.mxu0 0.0
    %620 = vmatpush1.msra.mxu0 0.0
    %621 = vmatprep.subr.mxu0 0.0
    %622 = vmatpush1.msra.mxu0 0.0
    %623 = vmatprep.subr.mxu0 0.0
    %624 = vmatpush1.msra.mxu0 0.0
    %625 = vmatprep.subr.mxu0 0.0
    %626 = vmatpush1.msra.mxu0 0.0
    %627 = vmatprep.subr.mxu0 0.0
    %628 = vmatpush1.msra.mxu0 0.0
    %629 = vmatprep.subr.mxu0 0.0
    %630 = vmatpush1.msra.mxu0 0.0
    %631 = vmatprep.subr.mxu0 0.0
    %632 = vmatpush1.msra.mxu0 0.0
    %633 = vmatprep.mubr.f32.mxu0 0.0
    %v634 = vand.u32 %v293, 4294901760
    %v635 = vsub.f32 %v293, %v634
    %636 = vmatmul.mubr.f32.gmra.mrb[0].mxu0 %v635
    %v637 = vpop.f32.mrb[0].mxu0
    %v638 = vadd.f32 %v534, %v637
    %v639 = vpop.f32.mrb[0].mxu0
    %640 = vdwg.mxu0
    %641 = vmatprep.subr.mxu0 0.0
    %v642 = vand.u32 %v256, 4294901760
    %643 = vmatpush1.msra.mxu0 %v642
    %644 = vmatprep.subr.mxu0 0.0
    %v645 = vand.u32 %v257, 4294901760
    %646 = vmatpush1.msra.mxu0 %v645
    %647 = vmatprep.subr.mxu0 0.0
    %v648 = vand.u32 %v258, 4294901760
    %649 = vmatpush1.msra.mxu0 %v648
    %650 = vmatprep.subr.mxu0 0.0
    %v651 = vand.u32 %v259, 4294901760
    %652 = vmatpush1.msra.mxu0 %v651
    %653 = vmatprep.subr.mxu0 0.0
    %v654 = vand.u32 %v260, 4294901760
    %655 = vmatpush1.msra.mxu0 %v654
    %656 = vmatprep.subr.mxu0 0.0
    %v657 = vand.u32 %v261, 4294901760
    %658 = vmatpush1.msra.mxu0 %v657
    %659 = vmatprep.subr.mxu0 0.0
    %v660 = vand.u32 %v262, 4294901760
    %661 = vmatpush1.msra.mxu0 %v660
    %662 = vmatprep.subr.mxu0 0.0
    %v663 = vand.u32 %v263, 4294901760
    %664 = vmatpush1.msra.mxu0 %v663
    %665 = vmatprep.subr.mxu0 0.0
    %v666 = vand.u32 %v264, 4294901760
    %667 = vmatpush1.msra.mxu0 %v666
    %668 = vmatprep.subr.mxu0 0.0
    %v669 = vand.u32 %v265, 4294901760
    %670 = vmatpush1.msra.mxu0 %v669
    %671 = vmatprep.subr.mxu0 0.0
    %v672 = vand.u32 %v266, 4294901760
    %673 = vmatpush1.msra.mxu0 %v672
    %674 = vmatprep.subr.mxu0 0.0
    %v675 = vand.u32 %v267, 4294901760
    %676 = vmatpush1.msra.mxu0 %v675
    %677 = vmatprep.subr.mxu0 0.0
    %v678 = vand.u32 %v268, 4294901760
    %679 = vmatpush1.msra.mxu0 %v678
    %680 = vmatprep.subr.mxu0 0.0
    %v681 = vand.u32 %v269, 4294901760
    %682 = vmatpush1.msra.mxu0 %v681
    %683 = vmatprep.subr.mxu0 0.0
    %v684 = vand.u32 %v270, 4294901760
    %685 = vmatpush1.msra.mxu0 %v684
    %686 = vmatprep.subr.mxu0 0.0
    %v687 = vand.u32 %v271, 4294901760
    %688 = vmatpush1.msra.mxu0 %v687
    %689 = vmatprep.subr.mxu0 0.0
    %690 = vmatpush1.msra.mxu0 0.0
    %691 = vmatprep.subr.mxu0 0.0
    %692 = vmatpush1.msra.mxu0 0.0
    %693 = vmatprep.subr.mxu0 0.0
    %694 = vmatpush1.msra.mxu0 0.0
    %695 = vmatprep.subr.mxu0 0.0
    %696 = vmatpush1.msra.mxu0 0.0
    %697 = vmatprep.subr.mxu0 0.0
    %698 = vmatpush1.msra.mxu0 0.0
    %699 = vmatprep.subr.mxu0 0.0
    %700 = vmatpush1.msra.mxu0 0.0
    %701 = vmatprep.subr.mxu0 0.0
    %702 = vmatpush1.msra.mxu0 0.0
    %703 = vmatprep.subr.mxu0 0.0
    %704 = vmatpush1.msra.mxu0 0.0
    %705 = vmatprep.subr.mxu0 0.0
    %706 = vmatpush1.msra.mxu0 0.0
    %707 = vmatprep.subr.mxu0 0.0
    %708 = vmatpush1.msra.mxu0 0.0
    %709 = vmatprep.subr.mxu0 0.0
    %710 = vmatpush1.msra.mxu0 0.0
    %711 = vmatprep.subr.mxu0 0.0
    %712 = vmatpush1.msra.mxu0 0.0
    %713 = vmatprep.subr.mxu0 0.0
    %714 = vmatpush1.msra.mxu0 0.0
    %715 = vmatprep.subr.mxu0 0.0
    %716 = vmatpush1.msra.mxu0 0.0
    %717 = vmatprep.subr.mxu0 0.0
    %718 = vmatpush1.msra.mxu0 0.0
    %719 = vmatprep.subr.mxu0 0.0
    %720 = vmatpush1.msra.mxu0 0.0
    %721 = vmatprep.mubr.f32.mxu0 0.0
    %v722 = vand.u32 %v293, 4294901760
    %v723 = vsub.f32 %v293, %v722
    %v724 = vand.u32 %v723, 4294901760
    %725 = vmatmul.mubr.f32.gmra.mrb[0].mxu0 %v724
    %v726 = vpop.f32.mrb[0].mxu0
    %v727 = vadd.f32 %v638, %v726
    %v728 = vpop.f32.mrb[0].mxu0
    %729 = vdwg.mxu0
    %730 = vmatprep.subr.mxu0 0.0
    %v731 = vand.u32 %v256, 4294901760
    %v732 = vsub.f32 %v256, %v731
    %v733 = vand.u32 %v732, 4294901760
    %734 = vmatpush1.msra.mxu0 %v733
    %735 = vmatprep.subr.mxu0 0.0
    %v736 = vand.u32 %v257, 4294901760
    %v737 = vsub.f32 %v257, %v736
    %v738 = vand.u32 %v737, 4294901760
    %739 = vmatpush1.msra.mxu0 %v738
    %740 = vmatprep.subr.mxu0 0.0
    %v741 = vand.u32 %v258, 4294901760
    %v742 = vsub.f32 %v258, %v741
    %v743 = vand.u32 %v742, 4294901760
    %744 = vmatpush1.msra.mxu0 %v743
    %745 = vmatprep.subr.mxu0 0.0
    %v746 = vand.u32 %v259, 4294901760
    %v747 = vsub.f32 %v259, %v746
    %v748 = vand.u32 %v747, 4294901760
    %749 = vmatpush1.msra.mxu0 %v748
    %750 = vmatprep.subr.mxu0 0.0
    %v751 = vand.u32 %v260, 4294901760
    %v752 = vsub.f32 %v260, %v751
    %v753 = vand.u32 %v752, 4294901760
    %754 = vmatpush1.msra.mxu0 %v753
    %755 = vmatprep.subr.mxu0 0.0
    %v756 = vand.u32 %v261, 4294901760
    %v757 = vsub.f32 %v261, %v756
    %v758 = vand.u32 %v757, 4294901760
    %759 = vmatpush1.msra.mxu0 %v758
    %760 = vmatprep.subr.mxu0 0.0
    %v761 = vand.u32 %v262, 4294901760
    %v762 = vsub.f32 %v262, %v761
    %v763 = vand.u32 %v762, 4294901760
    %764 = vmatpush1.msra.mxu0 %v763
    %765 = vmatprep.subr.mxu0 0.0
    %v766 = vand.u32 %v263, 4294901760
    %v767 = vsub.f32 %v263, %v766
    %v768 = vand.u32 %v767, 4294901760
    %769 = vmatpush1.msra.mxu0 %v768
    %770 = vmatprep.subr.mxu0 0.0
    %v771 = vand.u32 %v264, 4294901760
    %v772 = vsub.f32 %v264, %v771
    %v773 = vand.u32 %v772, 4294901760
    %774 = vmatpush1.msra.mxu0 %v773
    %775 = vmatprep.subr.mxu0 0.0
    %v776 = vand.u32 %v265, 4294901760
    %v777 = vsub.f32 %v265, %v776
    %v778 = vand.u32 %v777, 4294901760
    %779 = vmatpush1.msra.mxu0 %v778
    %780 = vmatprep.subr.mxu0 0.0
    %v781 = vand.u32 %v266, 4294901760
    %v782 = vsub.f32 %v266, %v781
    %v783 = vand.u32 %v782, 4294901760
    %784 = vmatpush1.msra.mxu0 %v783
    %785 = vmatprep.subr.mxu0 0.0
    %v786 = vand.u32 %v267, 4294901760
    %v787 = vsub.f32 %v267, %v786
    %v788 = vand.u32 %v787, 4294901760
    %789 = vmatpush1.msra.mxu0 %v788
    %790 = vmatprep.subr.mxu0 0.0
    %v791 = vand.u32 %v268, 4294901760
    %v792 = vsub.f32 %v268, %v791
    %v793 = vand.u32 %v792, 4294901760
    %794 = vmatpush1.msra.mxu0 %v793
    %795 = vmatprep.subr.mxu0 0.0
    %v796 = vand.u32 %v269, 4294901760
    %v797 = vsub.f32 %v269, %v796
    %v798 = vand.u32 %v797, 4294901760
    %799 = vmatpush1.msra.mxu0 %v798
    %800 = vmatprep.subr.mxu0 0.0
    %v801 = vand.u32 %v270, 4294901760
    %v802 = vsub.f32 %v270, %v801
    %v803 = vand.u32 %v802, 4294901760
    %804 = vmatpush1.msra.mxu0 %v803
    %805 = vmatprep.subr.mxu0 0.0
    %v806 = vand.u32 %v271, 4294901760
    %v807 = vsub.f32 %v271, %v806
    %v808 = vand.u32 %v807, 4294901760
    %809 = vmatpush1.msra.mxu0 %v808
    %810 = vmatprep.subr.mxu0 0.0
    %811 = vmatpush1.msra.mxu0 0.0
    %812 = vmatprep.subr.mxu0 0.0
    %813 = vmatpush1.msra.mxu0 0.0
    %814 = vmatprep.subr.mxu0 0.0
    %815 = vmatpush1.msra.mxu0 0.0
    %816 = vmatprep.subr.mxu0 0.0
    %817 = vmatpush1.msra.mxu0 0.0
    %818 = vmatprep.subr.mxu0 0.0
    %819 = vmatpush1.msra.mxu0 0.0
    %820 = vmatprep.subr.mxu0 0.0
    %821 = vmatpush1.msra.mxu0 0.0
    %822 = vmatprep.subr.mxu0 0.0
    %823 = vmatpush1.msra.mxu0 0.0
    %824 = vmatprep.subr.mxu0 0.0
    %825 = vmatpush1.msra.mxu0 0.0
    %826 = vmatprep.subr.mxu0 0.0
    %827 = vmatpush1.msra.mxu0 0.0
    %828 = vmatprep.subr.mxu0 0.0
    %829 = vmatpush1.msra.mxu0 0.0
    %830 = vmatprep.subr.mxu0 0.0
    %831 = vmatpush1.msra.mxu0 0.0
    %832 = vmatprep.subr.mxu0 0.0
    %833 = vmatpush1.msra.mxu0 0.0
    %834 = vmatprep.subr.mxu0 0.0
    %835 = vmatpush1.msra.mxu0 0.0
    %836 = vmatprep.subr.mxu0 0.0
    %837 = vmatpush1.msra.mxu0 0.0
    %838 = vmatprep.subr.mxu0 0.0
    %839 = vmatpush1.msra.mxu0 0.0
    %840 = vmatprep.subr.mxu0 0.0
    %841 = vmatpush1.msra.mxu0 0.0
    %842 = vmatprep.mubr.f32.mxu0 0.0
    %v843 = vand.u32 %v293, 4294901760
    %844 = vmatmul.mubr.f32.gmra.mrb[0].mxu0 %v843
    %v845 = vpop.f32.mrb[0].mxu0
    %v846 = vadd.f32 %v727, %v845
    %v847 = vpop.f32.mrb[0].mxu0
    %848 = vdwg.mxu0
    %849 = vmatprep.subr.mxu0 0.0
    %v850 = vand.u32 %v256, 4294901760
    %851 = vmatpush1.msra.mxu0 %v850
    %852 = vmatprep.subr.mxu0 0.0
    %v853 = vand.u32 %v257, 4294901760
    %854 = vmatpush1.msra.mxu0 %v853
    %855 = vmatprep.subr.mxu0 0.0
    %v856 = vand.u32 %v258, 4294901760
    %857 = vmatpush1.msra.mxu0 %v856
    %858 = vmatprep.subr.mxu0 0.0
    %v859 = vand.u32 %v259, 4294901760
    %860 = vmatpush1.msra.mxu0 %v859
    %861 = vmatprep.subr.mxu0 0.0
    %v862 = vand.u32 %v260, 4294901760
    %863 = vmatpush1.msra.mxu0 %v862
    %864 = vmatprep.subr.mxu0 0.0
    %v865 = vand.u32 %v261, 4294901760
    %866 = vmatpush1.msra.mxu0 %v865
    %867 = vmatprep.subr.mxu0 0.0
    %v868 = vand.u32 %v262, 4294901760
    %869 = vmatpush1.msra.mxu0 %v868
    %870 = vmatprep.subr.mxu0 0.0
    %v871 = vand.u32 %v263, 4294901760
    %872 = vmatpush1.msra.mxu0 %v871
    %873 = vmatprep.subr.mxu0 0.0
    %v874 = vand.u32 %v264, 4294901760
    %875 = vmatpush1.msra.mxu0 %v874
    %876 = vmatprep.subr.mxu0 0.0
    %v877 = vand.u32 %v265, 4294901760
    %878 = vmatpush1.msra.mxu0 %v877
    %879 = vmatprep.subr.mxu0 0.0
    %v880 = vand.u32 %v266, 4294901760
    %881 = vmatpush1.msra.mxu0 %v880
    %882 = vmatprep.subr.mxu0 0.0
    %v883 = vand.u32 %v267, 4294901760
    %884 = vmatpush1.msra.mxu0 %v883
    %885 = vmatprep.subr.mxu0 0.0
    %v886 = vand.u32 %v268, 4294901760
    %887 = vmatpush1.msra.mxu0 %v886
    %888 = vmatprep.subr.mxu0 0.0
    %v889 = vand.u32 %v269, 4294901760
    %890 = vmatpush1.msra.mxu0 %v889
    %891 = vmatprep.subr.mxu0 0.0
    %v892 = vand.u32 %v270, 4294901760
    %893 = vmatpush1.msra.mxu0 %v892
    %894 = vmatprep.subr.mxu0 0.0
    %v895 = vand.u32 %v271, 4294901760
    %896 = vmatpush1.msra.mxu0 %v895
    %897 = vmatprep.subr.mxu0 0.0
    %898 = vmatpush1.msra.mxu0 0.0
    %899 = vmatprep.subr.mxu0 0.0
    %900 = vmatpush1.msra.mxu0 0.0
    %901 = vmatprep.subr.mxu0 0.0
    %902 = vmatpush1.msra.mxu0 0.0
    %903 = vmatprep.subr.mxu0 0.0
    %904 = vmatpush1.msra.mxu0 0.0
    %905 = vmatprep.subr.mxu0 0.0
    %906 = vmatpush1.msra.mxu0 0.0
    %907 = vmatprep.subr.mxu0 0.0
    %908 = vmatpush1.msra.mxu0 0.0
    %909 = vmatprep.subr.mxu0 0.0
    %910 = vmatpush1.msra.mxu0 0.0
    %911 = vmatprep.subr.mxu0 0.0
    %912 = vmatpush1.msra.mxu0 0.0
    %913 = vmatprep.subr.mxu0 0.0
    %914 = vmatpush1.msra.mxu0 0.0
    %915 = vmatprep.subr.mxu0 0.0
    %916 = vmatpush1.msra.mxu0 0.0
    %917 = vmatprep.subr.mxu0 0.0
    %918 = vmatpush1.msra.mxu0 0.0
    %919 = vmatprep.subr.mxu0 0.0
    %920 = vmatpush1.msra.mxu0 0.0
    %921 = vmatprep.subr.mxu0 0.0
    %922 = vmatpush1.msra.mxu0 0.0
    %923 = vmatprep.subr.mxu0 0.0
    %924 = vmatpush1.msra.mxu0 0.0
    %925 = vmatprep.subr.mxu0 0.0
    %926 = vmatpush1.msra.mxu0 0.0
    %927 = vmatprep.subr.mxu0 0.0
    %928 = vmatpush1.msra.mxu0 0.0
    %929 = vmatprep.mubr.f32.mxu0 0.0
    %v930 = vand.u32 %v293, 4294901760
    %931 = vmatmul.mubr.f32.gmra.mrb[0].mxu0 %v930
    %v932 = vpop.f32.mrb[0].mxu0
    %v933 = vadd.f32 %v846, %v932
    %v934 = vpop.f32.mrb[0].mxu0
    %935 = vdwg.mxu0
    %936 = vst [vmem:[#allocation10] sm:$0xff] %v933
    // Predicated region
    $region34: #{tpu_custom_call.1} parent=1 // pred_check
      _
    $region35: #{tpu_custom_call.1} parent=1 // pred_check_branch
      %938 = sbr.rel (0) target = $region37
    $region36: #{tpu_custom_call.1} parent=1 // pred_region
      %s940 = ssub.s32 128, 128
      %941 = vsyncadd [#allocation4], %s940
      %s943 = sshll.u32 [#allocation10], 4
      %s944 = int_to_ptr.vmem [resolvable:$true] %s943
      %946 = dma.vmem_to_hbm [thread:$0]  %s944, 128, %s4, [#allocation4]
    $region37: #{tpu_custom_call.1} parent=1 // pred_fallthru
      _
    // Predicated region
    $region38: #{tpu_custom_call.1} parent=1 // pred_check
      _
    $region39: #{tpu_custom_call.1} parent=1 // pred_check_branch
      %948 = sbr.rel (0) target = $region41
    $region40: #{tpu_custom_call.1} parent=1 // pred_region
      %949 = dma.done [#allocation4], 128
    $region41: #{tpu_custom_call.1} parent=1 // pred_fallthru
      _
    %950 = vsyncpa [#allocation3], 1
    %951 = vsyncpa [#allocation6], 1
    %952 = vsyncpa [#allocation9], 1
    %953 = vsyncpa [#allocation4], 1

</llo_original>
